<compile_context>
chip_gen: v5e
topology: v5e:2x2
jax: 0.10.0
libtpu: 0.0.40
codegen_flags: <defaults>
</compile_context>

<pallas_src>
import jax
import jax.numpy as jnp
import numpy as np
from jax.experimental import pallas as pl
from jax.experimental.pallas import tpu as pltpu

# --- module-consistent config -------------------------------------------------
B = 2            # batch
C = 4            # input channels
H = W = 16       # spatial
HW = H * W
BASE_DIM = 2048  # resnet50 feature dim (matches nn.Linear(2048, ...))
SE = 32          # cfg.SEMANTIC_EMBED
BIT = 16         # cfg.bit
NCLASS = 8       # cfg.numClass

HEAD_DIM = SE + BIT + NCLASS           # 56 : fused cross|hash|label width
SLAB_USED = 4 * SE + BIT + NCLASS      # 152: fea|cross|mu|log_sigma|hsh|lab
SLAB_DIM = 256                         # lane-dense packed output width

# Parameter-slab row layout (lane width 128, f32), chosen so the MXU weight
# slice starts on a sublane-tile boundary:
W_HEADS_ROW = 0                        # rows [0, SE)    : fused head weight (SE x 128, zero-padded)
W_FOLD_ROW = SE                        # rows [SE, SE+C) : folded (C, 2*SE) weight
B_FOLD_ROW = SE + C                    # row  SE+C       : folded bias (2*SE)
B_HEADS_ROW = SE + C + 1               # row  SE+C+1     : fused head bias (HEAD_DIM)
PAR_ROWS = SE + C + 2                  # 38 used rows
PAR_ROWS_PAD = 40                      # padded to a multiple of 8 sublanes
PAR_COLS = 128


def mi_forward_kernel(act_ref, par_ref, out_ref):
    f32 = jnp.float32
    act = act_ref[...]                     # (B, C*HW + SE)   f32
    par = par_ref[...]                     # (PAR_ROWS_PAD, 128) f32
    bsz = act.shape[0]

    # Folded GAP + backbone-projection + self.feature:
    #   mu_sigma = mean_hw(x) @ (Wp @ Wf) + (bp @ Wf + bf)
    # as C=4 VPU broadcast-FMAs (exact f32, no MXU round-trip for K=4, M=2).
    ms = jnp.zeros((bsz, 2 * SE), f32)
    for c in range(C):                                                     # static unroll
        gap_c = jnp.mean(act[:, c * HW:(c + 1) * HW], axis=-1, keepdims=True)   # (B, 1)
        ms = ms + gap_c * par[W_FOLD_ROW + c:W_FOLD_ROW + c + 1, :2 * SE]
    ms = ms + par[B_FOLD_ROW:B_FOLD_ROW + 1, :2 * SE]                      # (B, 2*SE)

    mu = ms[:, :SE]
    log_sigma = ms[:, SE:]
    noise = act[:, C * HW:C * HW + SE]                                     # (B, SE)

    # Reparameterization: fea = relu(noise * exp(0.5*log_sigma) + mu)  (f32 VPU/EUP)
    std = jnp.exp(0.5 * log_sigma)
    fea = jnp.maximum(noise * std + mu, 0.0)

    # Fused cross_feature | hash | label head: one MXU push against the
    # zero-padded 128-lane weight tile (lanes >= HEAD_DIM of those rows are 0).
    heads = jnp.dot(fea, par[W_HEADS_ROW:W_HEADS_ROW + SE, :],
                    preferred_element_type=f32)                            # (B, 128)
    heads = heads + par[B_HEADS_ROW:B_HEADS_ROW + 1, :]
    cross = heads[:, :SE]
    hsh = jnp.tanh(heads[:, SE:SE + BIT])
    lab = jax.nn.sigmoid(heads[:, SE + BIT:HEAD_DIM])

    # Single lane-dense packed store: fea|cross|mu|log_sigma fill lanes 0..127
    # exactly; hsh|lab|zero-pad fill lanes 128..255.
    pad = jnp.zeros((bsz, SLAB_DIM - SLAB_USED), f32)
    out_ref[...] = jnp.concatenate([fea, cross, ms, hsh, lab, pad], axis=-1)


def prepare_params(params, fold_backbone=True):
    """One-time packing of the module weights into the kernel's parameter slab.

    fold_backbone=True folds the (GAP + Linear C->2048) backbone stand-in and
    self.feature (2048 -> 2*SE) into a single (C, 2*SE) linear, eliminating the
    2048-wide weight DMA from every forward.
    """
    # TODO(synk): folding is only valid for the linear GAP+Linear ResNet50
    # stand-in; once a real convolutional backbone lands, set
    # fold_backbone=False and ship w_feat as its own lane-dense operand
    # (e.g. split-K (1024, 128) bf16 repack) instead.
    if not fold_backbone:
        raise NotImplementedError("unfolded path needs the real backbone kernel")

    (w_proj, b_proj, w_feat, b_feat,
     w_cross, b_cross, w_hash, b_hash, w_lab, b_lab) = params

    hi = jax.lax.Precision.HIGHEST
    w_fold = jnp.dot(w_proj, w_feat, precision=hi)                       # (C, 2*SE)
    b_fold = jnp.dot(b_proj[None, :], w_feat, precision=hi)[0] + b_feat  # (2*SE,)
    w_heads = jnp.concatenate([w_cross, w_hash, w_lab], axis=1)          # (SE, HEAD_DIM)
    b_heads = jnp.concatenate([b_cross, b_hash, b_lab], axis=0)          # (HEAD_DIM,)

    slab = jnp.zeros((PAR_ROWS_PAD, PAR_COLS), jnp.float32)
    slab = slab.at[W_HEADS_ROW:W_HEADS_ROW + SE, :HEAD_DIM].set(w_heads)
    slab = slab.at[W_FOLD_ROW:W_FOLD_ROW + C, :2 * SE].set(w_fold)
    slab = slab.at[B_FOLD_ROW, :2 * SE].set(b_fold)
    slab = slab.at[B_HEADS_ROW, :HEAD_DIM].set(b_heads)
    return slab


def imagenet_mi_forward(x_nchw, noise, param_slab):
    """x_nchw: (B, C, H, W) f32; noise: (B, SE) f32; param_slab from prepare_params."""
    b = x_nchw.shape[0]
    # Per-call activation slab: flattened image | reparameterization noise.
    act = jnp.concatenate([x_nchw.reshape(b, C * HW), noise], axis=-1)    # (B, C*HW+SE)

    cost = pl.CostEstimate(
        flops=b * C * HW + 2 * b * C * 2 * SE + 2 * b * SE * HEAD_DIM + 4 * b * SE,
        transcendentals=b * (SE + BIT + NCLASS),
        bytes_accessed=act.size * 4 + param_slab.size * 4 + b * SLAB_DIM * 4,
    )

    vmem = pl.BlockSpec(memory_space=pltpu.MemorySpace.VMEM)
    # TODO(synk): at realistic batch (B >= ~256) add a grid over batch chunks
    # with dimension_semantics=("parallel",) so both v7x TensorCores get work;
    # at B=2 a single program is strictly cheaper than splitting.
    slab = pl.pallas_call(
        mi_forward_kernel,
        out_shape=jax.ShapeDtypeStruct((b, SLAB_DIM), jnp.float32),
        in_specs=[vmem, vmem],
        out_specs=vmem,
        cost_estimate=cost,
    )(act, param_slab)

    # Unpack the lane-dense slab back into the module's six outputs.
    fea = slab[:, 0:SE]
    cross = slab[:, SE:2 * SE]
    mu = slab[:, 2 * SE:3 * SE]
    log_sigma = slab[:, 3 * SE:4 * SE]
    hsh = slab[:, 4 * SE:4 * SE + BIT]
    lab = slab[:, 4 * SE + BIT:4 * SE + BIT + NCLASS]
    # Module return order: (fea_I, hsh_I, lab_I, fea_T_pred, mu_I, log_sigma_I).
    # torch.squeeze is a no-op at B=2 (no size-1 dims), so shapes match directly.
    return fea, hsh, lab, cross, mu, log_sigma


def reference_forward(x_nchw, noise, params):
    """Pure-JAX f32 reference mirroring the PyTorch forward (for validation)."""
    (w_proj, b_proj, w_feat, b_feat,
     w_cross, b_cross, w_hash, b_hash, w_lab, b_lab) = params
    hi = jax.lax.Precision.HIGHEST
    gap = jnp.mean(x_nchw, axis=(2, 3))
    base = jnp.dot(gap, w_proj, precision=hi) + b_proj
    mu_sigma = jnp.dot(base, w_feat, precision=hi) + b_feat
    mu = mu_sigma[:, :SE]
    log_sigma = mu_sigma[:, SE:]
    std = jnp.exp(0.5 * log_sigma)
    fea = jnp.maximum(noise * std + mu, 0.0)
    cross = jnp.dot(fea, w_cross, precision=hi) + b_cross
    hsh = jnp.tanh(jnp.dot(fea, w_hash, precision=hi) + b_hash)
    lab = jax.nn.sigmoid(jnp.dot(fea, w_lab, precision=hi) + b_lab)
    return fea, hsh, lab, cross, mu, log_sigma


def init_params(key):
    """nn.init.normal_(..., std=0.01) equivalent; weights stored as (in, out)."""
    ks = jax.random.split(key, 10)
    std = 0.01
    return (
        std * jax.random.normal(ks[0], (C, BASE_DIM), jnp.float32),        # backbone stand-in W
        std * jax.random.normal(ks[1], (BASE_DIM,), jnp.float32),          # backbone stand-in b
        std * jax.random.normal(ks[2], (BASE_DIM, 2 * SE), jnp.float32),   # feature W
        std * jax.random.normal(ks[3], (2 * SE,), jnp.float32),            # feature b
        std * jax.random.normal(ks[4], (SE, SE), jnp.float32),             # cross_feature W
        std * jax.random.normal(ks[5], (SE,), jnp.float32),                # cross_feature b
        std * jax.random.normal(ks[6], (SE, BIT), jnp.float32),            # hash W
        std * jax.random.normal(ks[7], (BIT,), jnp.float32),               # hash b
        std * jax.random.normal(ks[8], (SE, NCLASS), jnp.float32),         # label W
        std * jax.random.normal(ks[9], (NCLASS,), jnp.float32),            # label b
    )


if __name__ == "__main__":
    key = jax.random.PRNGKey(0)
    k_param, k_x, k_noise = jax.random.split(key, 3)

    params = init_params(k_param)
    param_slab = jax.block_until_ready(prepare_params(params))   # ONE-TIME weight prep

    x = jax.random.normal(k_x, (B, C, H, W), jnp.float32)
    noise = jax.random.normal(k_noise, (B, SE), jnp.float32)     # torch.randn_like(mu_I)

    outs = imagenet_mi_forward(x, noise, param_slab)
    outs = jax.block_until_ready(outs)

    refs = reference_forward(x, noise, params)

    # fea / mu / log_sigma (the KL-relevant outputs) take the exact-f32 VPU path
    # -> tight tolerance; cross / hsh / lab go through the tiny MXU head matmul
    # whose f32 passes may be reduced-precision on some generations -> looser.
    names = ("fea", "hsh", "lab", "cross", "mu", "log_sigma")
    tol = {
        "fea": dict(rtol=1e-3, atol=1e-4),
        "mu": dict(rtol=1e-3, atol=1e-4),
        "log_sigma": dict(rtol=1e-3, atol=1e-4),
        "cross": dict(rtol=1e-2, atol=1e-3),
        "hsh": dict(rtol=1e-2, atol=1e-3),
        "lab": dict(rtol=1e-2, atol=1e-3),
    }
    for name, o, r in zip(names, outs, refs):
        np.testing.assert_allclose(np.asarray(o), np.asarray(r), **tol[name])

    print("KERNEL_OK")
</pallas_src>

<mosaic_0001>
module attributes {stable_mosaic.version = 11 : i64} {
  func.func @mi_forward_kernel(%arg0: memref<2x1056xf32, #tpu.memory_space<vmem>>, %arg1: memref<40x128xf32, #tpu.memory_space<vmem>>, %arg2: memref<2x256xf32, #tpu.memory_space<vmem>>) attributes {dimension_semantics = [], scalar_prefetch = 0 : i64, scratch_operands = 0 : i64, tpu.core_type = #tpu.core_type<tc>} {
    %c0 = arith.constant 0 : index
    %c0_0 = arith.constant 0 : index
    %0 = vector.load %arg0[%c0, %c0_0] : memref<2x1056xf32, #tpu.memory_space<vmem>>, vector<2x1056xf32>
    %c0_1 = arith.constant 0 : index
    %c0_2 = arith.constant 0 : index
    %1 = vector.load %arg1[%c0_1, %c0_2] : memref<40x128xf32, #tpu.memory_space<vmem>>, vector<40x128xf32>
    %cst = arith.constant 0.000000e+00 : f32
    %2 = vector.broadcast %cst : f32 to vector<2x64xf32>
    %3 = vector.extract_strided_slice %0 {offsets = [0, 0], sizes = [2, 256], strides = [1, 1]} : vector<2x1056xf32> to vector<2x256xf32>
    %cst_3 = arith.constant dense<0.000000e+00> : vector<2xf32>
    %4 = vector.multi_reduction <add>, %3, %cst_3 [1] : vector<2x256xf32> to vector<2xf32>
    %5 = vector.shape_cast %4 : vector<2xf32> to vector<2x1xf32>
    %cst_4 = arith.constant 2.560000e+02 : f32
    %6 = vector.broadcast %cst_4 : f32 to vector<2x1xf32>
    %7 = arith.divf %5, %6 : vector<2x1xf32>
    %8 = vector.extract_strided_slice %1 {offsets = [32, 0], sizes = [1, 64], strides = [1, 1]} : vector<40x128xf32> to vector<1x64xf32>
    %9 = vector.broadcast %7 : vector<2x1xf32> to vector<2x64xf32>
    %10 = vector.broadcast %8 : vector<1x64xf32> to vector<2x64xf32>
    %11 = arith.mulf %9, %10 : vector<2x64xf32>
    %12 = arith.addf %2, %11 : vector<2x64xf32>
    %13 = vector.extract_strided_slice %0 {offsets = [0, 256], sizes = [2, 256], strides = [1, 1]} : vector<2x1056xf32> to vector<2x256xf32>
    %cst_5 = arith.constant dense<0.000000e+00> : vector<2xf32>
    %14 = vector.multi_reduction <add>, %13, %cst_5 [1] : vector<2x256xf32> to vector<2xf32>
    %15 = vector.shape_cast %14 : vector<2xf32> to vector<2x1xf32>
    %cst_6 = arith.constant 2.560000e+02 : f32
    %16 = vector.broadcast %cst_6 : f32 to vector<2x1xf32>
    %17 = arith.divf %15, %16 : vector<2x1xf32>
    %18 = vector.extract_strided_slice %1 {offsets = [33, 0], sizes = [1, 64], strides = [1, 1]} : vector<40x128xf32> to vector<1x64xf32>
    %19 = vector.broadcast %17 : vector<2x1xf32> to vector<2x64xf32>
    %20 = vector.broadcast %18 : vector<1x64xf32> to vector<2x64xf32>
    %21 = arith.mulf %19, %20 : vector<2x64xf32>
    %22 = arith.addf %12, %21 : vector<2x64xf32>
    %23 = vector.extract_strided_slice %0 {offsets = [0, 512], sizes = [2, 256], strides = [1, 1]} : vector<2x1056xf32> to vector<2x256xf32>
    %cst_7 = arith.constant dense<0.000000e+00> : vector<2xf32>
    %24 = vector.multi_reduction <add>, %23, %cst_7 [1] : vector<2x256xf32> to vector<2xf32>
    %25 = vector.shape_cast %24 : vector<2xf32> to vector<2x1xf32>
    %cst_8 = arith.constant 2.560000e+02 : f32
    %26 = vector.broadcast %cst_8 : f32 to vector<2x1xf32>
    %27 = arith.divf %25, %26 : vector<2x1xf32>
    %28 = vector.extract_strided_slice %1 {offsets = [34, 0], sizes = [1, 64], strides = [1, 1]} : vector<40x128xf32> to vector<1x64xf32>
    %29 = vector.broadcast %27 : vector<2x1xf32> to vector<2x64xf32>
    %30 = vector.broadcast %28 : vector<1x64xf32> to vector<2x64xf32>
    %31 = arith.mulf %29, %30 : vector<2x64xf32>
    %32 = arith.addf %22, %31 : vector<2x64xf32>
    %33 = vector.extract_strided_slice %0 {offsets = [0, 768], sizes = [2, 256], strides = [1, 1]} : vector<2x1056xf32> to vector<2x256xf32>
    %cst_9 = arith.constant dense<0.000000e+00> : vector<2xf32>
    %34 = vector.multi_reduction <add>, %33, %cst_9 [1] : vector<2x256xf32> to vector<2xf32>
    %35 = vector.shape_cast %34 : vector<2xf32> to vector<2x1xf32>
    %cst_10 = arith.constant 2.560000e+02 : f32
    %36 = vector.broadcast %cst_10 : f32 to vector<2x1xf32>
    %37 = arith.divf %35, %36 : vector<2x1xf32>
    %38 = vector.extract_strided_slice %1 {offsets = [35, 0], sizes = [1, 64], strides = [1, 1]} : vector<40x128xf32> to vector<1x64xf32>
    %39 = vector.broadcast %37 : vector<2x1xf32> to vector<2x64xf32>
    %40 = vector.broadcast %38 : vector<1x64xf32> to vector<2x64xf32>
    %41 = arith.mulf %39, %40 : vector<2x64xf32>
    %42 = arith.addf %32, %41 : vector<2x64xf32>
    %43 = vector.extract_strided_slice %1 {offsets = [36, 0], sizes = [1, 64], strides = [1, 1]} : vector<40x128xf32> to vector<1x64xf32>
    %44 = vector.broadcast %43 : vector<1x64xf32> to vector<2x64xf32>
    %45 = arith.addf %42, %44 : vector<2x64xf32>
    %46 = vector.extract_strided_slice %45 {offsets = [0, 0], sizes = [2, 32], strides = [1, 1]} : vector<2x64xf32> to vector<2x32xf32>
    %47 = vector.extract_strided_slice %45 {offsets = [0, 32], sizes = [2, 32], strides = [1, 1]} : vector<2x64xf32> to vector<2x32xf32>
    %48 = vector.extract_strided_slice %0 {offsets = [0, 1024], sizes = [2, 32], strides = [1, 1]} : vector<2x1056xf32> to vector<2x32xf32>
    %cst_11 = arith.constant 5.000000e-01 : f32
    %49 = vector.broadcast %cst_11 : f32 to vector<2x32xf32>
    %50 = arith.mulf %49, %47 : vector<2x32xf32>
    %51 = math.exp %50 : vector<2x32xf32>
    %52 = arith.mulf %48, %51 : vector<2x32xf32>
    %53 = arith.addf %52, %46 : vector<2x32xf32>
    %cst_12 = arith.constant 0.000000e+00 : f32
    %54 = vector.broadcast %cst_12 : f32 to vector<2x32xf32>
    %55 = arith.maximumf %53, %54 : vector<2x32xf32>
    %56 = vector.extract_strided_slice %1 {offsets = [0, 0], sizes = [32, 128], strides = [1, 1]} : vector<40x128xf32> to vector<32x128xf32>
    %cst_13 = arith.constant dense<0.000000e+00> : vector<2x128xf32>
    %57 = tpu.matmul %55, %56, %cst_13 {dimension_numbers = #tpu.dot_dimension_numbers<[1], [0], [0], [1], [0, 0, 1, 1], [], []>} : vector<2x32xf32>, vector<32x128xf32>, vector<2x128xf32> -> vector<2x128xf32>
    %58 = vector.extract_strided_slice %1 {offsets = [37, 0], sizes = [1, 128], strides = [1, 1]} : vector<40x128xf32> to vector<1x128xf32>
    %59 = vector.broadcast %58 : vector<1x128xf32> to vector<2x128xf32>
    %60 = arith.addf %57, %59 : vector<2x128xf32>
    %61 = vector.extract_strided_slice %60 {offsets = [0, 0], sizes = [2, 32], strides = [1, 1]} : vector<2x128xf32> to vector<2x32xf32>
    %62 = vector.extract_strided_slice %60 {offsets = [0, 32], sizes = [2, 16], strides = [1, 1]} : vector<2x128xf32> to vector<2x16xf32>
    %63 = math.tanh %62 : vector<2x16xf32>
    %64 = vector.extract_strided_slice %60 {offsets = [0, 48], sizes = [2, 8], strides = [1, 1]} : vector<2x128xf32> to vector<2x8xf32>
    %65 = arith.negf %64 : vector<2x8xf32>
    %66 = math.exp %65 : vector<2x8xf32>
    %cst_14 = arith.constant 1.000000e+00 : f32
    %67 = vector.broadcast %cst_14 : f32 to vector<2x8xf32>
    %68 = arith.addf %67, %66 : vector<2x8xf32>
    %69 = arith.divf %67, %68 : vector<2x8xf32>
    %cst_15 = arith.constant 0.000000e+00 : f32
    %70 = vector.broadcast %cst_15 : f32 to vector<2x104xf32>
    %71 = tpu.concatenate %55, %61, %45, %63, %69, %70 in 1 : vector<2x32xf32>, vector<2x32xf32>, vector<2x64xf32>, vector<2x16xf32>, vector<2x8xf32>, vector<2x104xf32> -> vector<2x256xf32>
    %c0_16 = arith.constant 0 : index
    %c0_17 = arith.constant 0 : index
    %72 = vector.load %arg2[%c0_16, %c0_17] : memref<2x256xf32, #tpu.memory_space<vmem>>, vector<2x256xf32>
    tpu.vector_store %arg2[%c0_16, %c0_17], %71 {strides = array<i32>} : memref<2x256xf32, #tpu.memory_space<vmem>>, vector<2x256xf32>,
    return
  }
}

</mosaic_0001>

<llo_original>
// kernel: tpu_custom_call.1
$region0: #{tpu_custom_call.1}
  #allocation0 [shape = 'u32[]', space=smem, size = 0x4, offset = 0x4, fixed_abs, tag = 'smem constant byte address 0x4 - core index']
  #allocation1 [shape = 'u32[72,128]{1,0:T(1,128)}', space=vmem, size = 0x9000, scoped, tag = 'internal scratch']
  %s0 = inlined_call_operand.hbm [shape: f32[2,1056], index: 0, kind: input, shape index: {}]
  %s1 = inlined_call_operand.hbm [shape: f32[40,128], index: 1, kind: input, shape index: {}]
  %s2 = inlined_call_operand.hbm [shape: f32[2,256], index: 2, kind: output, shape index: {}]
  %s3 = sld [smem:[#allocation0]]
  $region26: #{tpu_custom_call.1} parent=0
    _
  %s5 = ssub.s32 1, %s3
  %s6 = scalar_select 0, %s5, %s3
  $region1: #{tpu_custom_call.1} parent=0
    #allocation2 [shape = 'u8[9216]{0}', space=vmem, size = 0x2400, scoped, tag = 'input window, operand 0, single buffered']
    #allocation3 [shape = 's32[1]{0}', space=sflag, size = 0x4, scoped, tag = 'scoped memory for tpu_custom_call.1']
    #allocation4 [shape = 's32[1]{0}', space=sflag, size = 0x4, scoped, tag = 'scoped memory for tpu_custom_call.1']
    #allocation5 [shape = 'u8[20480]{0}', space=vmem, size = 0x5000, scoped, tag = 'input window, operand 1, single buffered']
    #allocation6 [shape = 's32[1]{0}', space=sflag, size = 0x4, scoped, tag = 'scoped memory for tpu_custom_call.1']
    #allocation7 [shape = 'u8[2048]{0}', space=vmem, size = 0x800, scoped, tag = 'output window, operand 0, single buffered']
    %7 = vsyncpa [#allocation3], 0
    %8 = vsyncpa [#allocation6], 0
    %9 = vsyncpa [#allocation4], 0
    // Predicated region
    $region2: #{tpu_custom_call.1} parent=1 // pred_check
      _
    $region3: #{tpu_custom_call.1} parent=1 // pred_check_branch
      %11 = sbr.rel (0) target = $region5
    $region4: #{tpu_custom_call.1} parent=1 // pred_region
      %13 = vsyncadd [#allocation3], 0
      %s15 = sshll.u32 %s0, 4
      %s16 = int_to_ptr.hbm [resolvable:$true] %s15
      %s17 = sshll.u32 [#allocation2], 4
      %s18 = int_to_ptr.vmem [resolvable:$true] %s17
      %20 = dma.hbm_to_vmem [thread:$0]  %s16, 288, %s18, [#allocation3]
    $region5: #{tpu_custom_call.1} parent=1 // pred_fallthru
      _
    // Predicated region
    $region6: #{tpu_custom_call.1} parent=1 // pred_check
      _
    $region7: #{tpu_custom_call.1} parent=1 // pred_check_branch
      %22 = sbr.rel (0) target = $region9
    $region8: #{tpu_custom_call.1} parent=1 // pred_region
      %24 = vsyncadd [#allocation6], 0
      %s25 = sshll.u32 %s1, 4
      %s26 = int_to_ptr.hbm [resolvable:$true] %s25
      %s27 = sshll.u32 [#allocation5], 4
      %s28 = int_to_ptr.vmem [resolvable:$true] %s27
      %33 = dma.hbm_to_vmem [thread:$0]  %s26, 640, %s28, [#allocation6], 128, 128, 8
    $region9: #{tpu_custom_call.1} parent=1 // pred_fallthru
      _
    // Predicated region
    $region10: #{tpu_custom_call.1} parent=1 // pred_check
      _
    $region11: #{tpu_custom_call.1} parent=1 // pred_check_branch
      %35 = sbr.rel (0) target = $region13
    $region12: #{tpu_custom_call.1} parent=1 // pred_region
      %37 = dma.done [#allocation3], 288
    $region13: #{tpu_custom_call.1} parent=1 // pred_fallthru
      _
    // Predicated region
    $region14: #{tpu_custom_call.1} parent=1 // pred_check
      _
    $region15: #{tpu_custom_call.1} parent=1 // pred_check_branch
      %39 = sbr.rel (0) target = $region17
    $region16: #{tpu_custom_call.1} parent=1 // pred_region
      %41 = dma.done [#allocation6], 640
    $region17: #{tpu_custom_call.1} parent=1 // pred_fallthru
      _
    %v42 = vld [vmem:[#allocation2] sm:$0xff]
    %v43 = vld [vmem:[#allocation2 + $0x8] sm:$0xff]
    %v44 = vld [vmem:[#allocation2 + $0x10] sm:$0x3]
    %v45 = vld [vmem:[#allocation5] sm:$0xff]
    %v46 = vld [vmem:[#allocation5 + $0x8] sm:$0xff]
    %v47 = vld [vmem:[#allocation5 + $0x10] sm:$0xff]
    %v48 = vld [vmem:[#allocation5 + $0x18] sm:$0xff]
    %v49 = vld [vmem:[#allocation5 + $0x20] sm:$0xff]
    %51 = vst [vmem:[#allocation1] ss:$4 sm:$0xff] %v42
    %v52 = vld.sshfl [vmem:[#allocation1] sm:$0xff pattern:$0x73625140]
    %v53 = vld.sshfl [vmem:[#allocation1 + $0x8] sm:$0xff pattern:$0x73625140]
    %vm56 = vcmask 1041408
    %v57 = vsel %vm56, %v52, 0.0
    %v58 = vsel %vm56, %v53, 0.0
    %v59 = vadd.f32 %v57, %v58
    %60 = vadd.xlane.f32.xlu0 %v59
    %v61 = vpop.xlane.xlu0 %60
    %v62 = vrcp.pop 256.0
    %v63 = vmul.f32 256.0, %v62
    %v64 = vsub.f32 1.0, %v63
    %v65 = vmul.f32 %v62, %v64
    %v66 = vadd.f32 %v62, %v65
    %vm67 = vweird.f32 %v62
    %v68 = vsel %vm67, %v62, %v66
    %v69 = vmul.f32 %v61, %v68
    %v70 = vperm.slane %v49, 0
    %v71 = vmul.f32 %v69, %v70
    %v72 = vadd.f32 %v71, 0.0
    %73 = vst [vmem:[#allocation1] ss:$4 sm:$0xff] %v42
    %v74 = vld.sshfl [vmem:[#allocation1 + $0x10] sm:$0xff pattern:$0x73625140]
    %v75 = vld.sshfl [vmem:[#allocation1 + $0x18] sm:$0xff pattern:$0x73625140]
    %v78 = vsel %vm56, %v74, 0.0
    %v79 = vsel %vm56, %v75, 0.0
    %v80 = vadd.f32 %v78, %v79
    %81 = vadd.xlane.f32.xlu0 %v80
    %v82 = vpop.xlane.xlu0 %81
    %v83 = vmul.f32 %v82, %v68
    %v84 = vperm.slane %v49, 1
    %v85 = vmul.f32 %v83, %v84
    %v86 = vadd.f32 %v72, %v85
    %88 = vst [vmem:[#allocation1] ss:$4 sm:$0xff] %v43
    %v89 = vld.sshfl [vmem:[#allocation1] sm:$0xff pattern:$0x73625140]
    %v90 = vld.sshfl [vmem:[#allocation1 + $0x8] sm:$0xff pattern:$0x73625140]
    %v93 = vsel %vm56, %v89, 0.0
    %v94 = vsel %vm56, %v90, 0.0
    %v95 = vadd.f32 %v93, %v94
    %96 = vadd.xlane.f32.xlu0 %v95
    %v97 = vpop.xlane.xlu0 %96
    %v98 = vmul.f32 %v97, %v68
    %v99 = vperm.slane %v49, 2
    %v100 = vmul.f32 %v98, %v99
    %v101 = vadd.f32 %v86, %v100
    %102 = vst [vmem:[#allocation1] ss:$4 sm:$0xff] %v43
    %v103 = vld.sshfl [vmem:[#allocation1 + $0x10] sm:$0xff pattern:$0x73625140]
    %v104 = vld.sshfl [vmem:[#allocation1 + $0x18] sm:$0xff pattern:$0x73625140]
    %v107 = vsel %vm56, %v103, 0.0
    %v108 = vsel %vm56, %v104, 0.0
    %v109 = vadd.f32 %v107, %v108
    %110 = vadd.xlane.f32.xlu0 %v109
    %v111 = vpop.xlane.xlu0 %110
    %v112 = vmul.f32 %v111, %v68
    %v113 = vperm.slane %v49, 3
    %v114 = vmul.f32 %v112, %v113
    %v115 = vadd.f32 %v101, %v114
    %v116 = vperm.slane %v49, 4
    %v117 = vadd.f32 %v115, %v116
    %v118 = vmul.f32 %v117, 0.5
    %v119 = vmul.f32 %v118, 1.442695
    %v120 = vpow.pop %v119
    %122 = vrot.lane.b32.xlu0 %v120, 96
    %v123 = vpop.permute.xlu0 %122
    %v125 = vmul.f32 %v44, %v123
    %v126 = vadd.f32 %v125, %v117
    %v127 = vmax.f32 %v126, 0.0
    %v128 = vperm.slane %v49, 5
    %vm129 = vcmask 261120
    %v131 = vsel %vm129, %v127, 0
    %133 = vmatpush.msra.mxu0 0.0
    %134 = vmatpush.msra.mxu0 0.0
    %135 = vmatpush.msra.mxu0 0.0
    %136 = vmatpush.msra.mxu0 0.0
    %137 = vmatpush.msra.mxu0 0.0
    %138 = vmatpush.msra.mxu0 0.0
    %139 = vmatpush.msra.mxu0 0.0
    %140 = vmatpush.msra.mxu0 0.0
    %141 = vmatpush.msra.mxu0 0.0
    %142 = vmatpush.msra.mxu0 0.0
    %143 = vmatpush.msra.mxu0 0.0
    %144 = vmatpush.msra.mxu0 0.0
    %145 = vmatpush.msra.mxu0 %v48
    %146 = vmatpush.msra.mxu0 %v47
    %147 = vmatpush.msra.mxu0 %v46
    %148 = vmatpush.msra.mxu0 %v45
    %149 = vmatmul.f32.gmra.mxu0 %v131
    %v150 = vpop.f32.mrf.mxu0
    %v151 = vadd.f32 %v128, %v150
    %152 = vdwg.mxu0
    %v153 = vtanh.pop %v151
    %v154 = vxor.u32 %v151, 2147483648
    %v155 = vmul.f32 %v154, 1.442695
    %v156 = vpow.pop %v155
    %v157 = vadd.f32 %v156, 1.0
    %v158 = vrcp.pop %v157
    %v159 = vmul.f32 %v157, %v158
    %v160 = vsub.f32 1.0, %v159
    %v161 = vmul.f32 %v158, %v160
    %v162 = vadd.f32 %v158, %v161
    %vm163 = vweird.f32 %v157
    %vm164 = vweird.f32 %v158
    %vm165 = vmor %vm163, %vm164
    %v166 = vsel %vm165, %v158, %v162
    %v167 = vand.u32 2147483647, %v157
    %vm168 = vcmp.eq.f32.partialorder %v167, 8.507059e+37
    %v169 = vand.u32 %v157, 2147483648
    %v170 = vor.u32 1.1754944e-38, %v169
    %v171 = vsel %vm168, %v170, %v166
    %v172 = vmul.f32 1.0, %v171
    %174 = vrot.lane.b32.xlu0 %v151, 32
    %v175 = vpop.permute.xlu0 %174
    %178 = vrot.lane.b32.xlu0 %v117, 64
    %v179 = vpop.permute.xlu0 %178
    %182 = vrot.lane.b32.xlu0 %v153, 96
    %v183 = vpop.permute.xlu0 %182
    %186 = vrot.lane.b32.xlu0 %v172, 96
    %v187 = vpop.permute.xlu0 %186
    %v189 = vsel %vm129, %v127, %v175
    %vm190 = vcmask 523264
    %v191 = vsel %vm190, %v189, %v179
    %vm192 = vcmask 130048
    %v193 = vsel %vm192, %v183, %v187
    %vm194 = vcmask 195584
    %v195 = vsel %vm194, %v193, 0.0
    %v198 = vrot.slane %v195, 6
    %v199 = vsel %vm56, %v191, %v198
    %201 = vst [vmem:[#allocation7] sm:$0xf] %v199
    // Predicated region
    $region18: #{tpu_custom_call.1} parent=1 // pred_check
      _
    $region19: #{tpu_custom_call.1} parent=1 // pred_check_branch
      %203 = sbr.rel (0) target = $region21
    $region20: #{tpu_custom_call.1} parent=1 // pred_region
      %205 = vsyncadd [#allocation4], 0
      %s207 = sshll.u32 [#allocation7], 4
      %s208 = int_to_ptr.vmem [resolvable:$true] %s207
      %s209 = sshll.u32 %s2, 4
      %s210 = int_to_ptr.hbm [resolvable:$true] %s209
      %212 = dma.vmem_to_hbm [thread:$0]  %s208, 64, %s210, [#allocation4]
    $region21: #{tpu_custom_call.1} parent=1 // pred_fallthru
      _
    // Predicated region
    $region22: #{tpu_custom_call.1} parent=1 // pred_check
      _
    $region23: #{tpu_custom_call.1} parent=1 // pred_check_branch
      %214 = sbr.rel (0) target = $region25
    $region24: #{tpu_custom_call.1} parent=1 // pred_region
      %216 = dma.done [#allocation4], 64
    $region25: #{tpu_custom_call.1} parent=1 // pred_fallthru
      _
    %217 = vsyncpa [#allocation3], 1
    %218 = vsyncpa [#allocation6], 1
    %219 = vsyncpa [#allocation4], 1

</llo_original>
